<compile_context>
chip_gen: v7x
topology: tpu7x:2x2x1
jax: 0.10.0
libtpu: 0.0.40
codegen_flags: <defaults>
</compile_context>

<pallas_src>
import math

import jax
import jax.numpy as jnp
from jax.experimental import pallas as pl
from jax.experimental.pallas import tpu as pltpu


HIDDEN = 256


# ----------------------------- Pallas kernels ------------------------------


def _fused_kernel(
    x_ref, xn_ref,
    w1_ref, b1_ref, w2_ref, b2_ref, wq_ref,
    w3_ref, b3_ref, wqt_ref,
    bq_ref, bqt_ref,
    out_ref,
):
    """Both heads in one kernel.  Weights resident (same block every step).

    out_ref block is (2, bt):  row 0 = q_value, row 1 = q_t  (lane-dense).
    """
    # ---- q_value path: relu(fc1) -> relu(fc2) -> fc_q ----
    h1 = jnp.dot(x_ref[...], w1_ref[...], preferred_element_type=jnp.float32)
    h1 = jnp.maximum(h1 + b1_ref[...], 0.0)

    h2 = jnp.dot(h1.astype(w2_ref.dtype), w2_ref[...],
                 preferred_element_type=jnp.float32)
    h2 = jnp.maximum(h2 + b2_ref[...], 0.0)

    # fc_q (N=1) as a VPU/XLU lane reduction instead of a degenerate matmul.
    q = jnp.sum(h2 * wq_ref[...], axis=-1) + bq_ref[0]          # (bt,)

    # ---- q_t path: relu(fc3) -> fc_qt ----
    h3 = jnp.dot(xn_ref[...], w3_ref[...], preferred_element_type=jnp.float32)
    h3 = jnp.maximum(h3 + b3_ref[...], 0.0)
    qt = jnp.sum(h3 * wqt_ref[...], axis=-1) + bqt_ref[0]       # (bt,)

    # Single full-block, lane-dense store.
    out_ref[...] = jnp.stack([q, qt]).astype(out_ref.dtype)


def _q_only_kernel(
    x_ref,
    w1_ref, b1_ref, w2_ref, b2_ref, wq_ref,
    bq_ref,
    out_ref,
):
    """q_value path only (next_obs / next_acts is None).  out block is (1, bt)."""
    h1 = jnp.dot(x_ref[...], w1_ref[...], preferred_element_type=jnp.float32)
    h1 = jnp.maximum(h1 + b1_ref[...], 0.0)

    h2 = jnp.dot(h1.astype(w2_ref.dtype), w2_ref[...],
                 preferred_element_type=jnp.float32)
    h2 = jnp.maximum(h2 + b2_ref[...], 0.0)

    q = jnp.sum(h2 * wq_ref[...], axis=-1) + bq_ref[0]          # (bt,)
    out_ref[...] = q[None, :].astype(out_ref.dtype)


# ------------------------------ JAX wrappers --------------------------------


def _round_up(x, m):
    return -(-x // m) * m


def _batch_block(b):
    """Batch tile choice.

    * B < 256: one full block (rounded to a multiple of 8) -> single grid step,
      out block last dim == full array dim so any width is legal.
    * B >= 256: tile is a multiple of 128 (lane-dense out blocks) and chosen so
      the grid has >= 2 steps (lets v7x shard the batch axis across both
      TensorCores); cap at 512 rows to amortize the ~0.35us per-step overhead.
    """
    if b < 256:
        return _round_up(b, 8)
    return min(_round_up(-(-b // 2), 128), 512)


def _pack_pad(obs, acts, rows):
    """torch.cat([obs, acts], -1) + zero-pad batch to `rows`, in one pass."""
    x = jnp.concatenate([obs, acts], axis=-1)
    pad = rows - x.shape[0]
    if pad:
        x = jnp.pad(x, ((0, pad), (0, 0)))
    return x


def _resident(shape):
    """BlockSpec for a weight/bias that is the same full block at every step."""
    ndim = len(shape)
    return pl.BlockSpec(shape, lambda i: (0,) * ndim)


_SMEM_SPEC = pl.BlockSpec(memory_space=pltpu.MemorySpace.SMEM)


def _fused_call(params, obs, acts, nobs, nacts, use_bf16):
    B = obs.shape[0]
    bt = _batch_block(B)
    nb = pl.cdiv(B, bt)
    Bp = nb * bt

    x = _pack_pad(obs, acts, Bp)
    xn = _pack_pad(nobs, nacts, Bp)
    in_dim = x.shape[1]

    mat_dt = jnp.bfloat16 if use_bf16 else jnp.float32
    x, xn = x.astype(mat_dt), xn.astype(mat_dt)
    w1 = params["w1"].astype(mat_dt)
    w2 = params["w2"].astype(mat_dt)
    wq = params["wq"].astype(mat_dt)
    w3 = params["w3"].astype(mat_dt)
    wqt = params["wqt"].astype(mat_dt)

    in_specs = [
        pl.BlockSpec((bt, in_dim), lambda i: (i, 0)),    # x  = [obs | acts]
        pl.BlockSpec((bt, in_dim), lambda i: (i, 0)),    # xn = [nobs | nacts]
        _resident(w1.shape), _resident(params["b1"].shape),
        _resident(w2.shape), _resident(params["b2"].shape),
        _resident(wq.shape),
        _resident(w3.shape), _resident(params["b3"].shape),
        _resident(wqt.shape),
        _SMEM_SPEC, _SMEM_SPEC,                          # bq, bqt scalars
    ]

    out = pl.pallas_call(
        _fused_kernel,
        out_shape=jax.ShapeDtypeStruct((2, Bp), jnp.float32),
        grid=(nb,),
        in_specs=in_specs,
        out_specs=pl.BlockSpec((2, bt), lambda i: (0, i)),
        # TODO(synk): on v7x, sweep pltpu.CORE_PARALLEL here.
        compiler_params=pltpu.CompilerParams(dimension_semantics=("parallel",)),
    )(
        x, xn,
        w1, params["b1"], w2, params["b2"], wq,
        w3, params["b3"], wqt,
        params["bq"], params["bqt"],
    )
    q = out[0, :B].reshape(B, 1)
    qt = out[1, :B].reshape(B, 1)
    return q, qt


def _q_only_call(params, obs, acts, use_bf16):
    B = obs.shape[0]
    bt = _batch_block(B)
    nb = pl.cdiv(B, bt)
    Bp = nb * bt

    x = _pack_pad(obs, acts, Bp)
    in_dim = x.shape[1]

    mat_dt = jnp.bfloat16 if use_bf16 else jnp.float32
    x = x.astype(mat_dt)
    w1 = params["w1"].astype(mat_dt)
    w2 = params["w2"].astype(mat_dt)
    wq = params["wq"].astype(mat_dt)

    in_specs = [
        pl.BlockSpec((bt, in_dim), lambda i: (i, 0)),
        _resident(w1.shape), _resident(params["b1"].shape),
        _resident(w2.shape), _resident(params["b2"].shape),
        _resident(wq.shape),
        _SMEM_SPEC,
    ]

    out = pl.pallas_call(
        _q_only_kernel,
        out_shape=jax.ShapeDtypeStruct((1, Bp), jnp.float32),
        grid=(nb,),
        in_specs=in_specs,
        out_specs=pl.BlockSpec((1, bt), lambda i: (0, i)),
        compiler_params=pltpu.CompilerParams(dimension_semantics=("parallel",)),
    )(
        x,
        w1, params["b1"], w2, params["b2"], wq,
        params["bq"],
    )
    return out[0, :B].reshape(B, 1)


def reward2_forward(params, obs_ph, acts, next_obs_ph=None, next_acts=None,
                    use_bf16=False):
    """Mirror of Reward_2.forward.  Returns (q_value, q_t); q_t is None if no next-state."""
    if next_obs_ph is not None and next_acts is not None:
        return _fused_call(params, obs_ph, acts, next_obs_ph, next_acts, use_bf16)
    return _q_only_call(params, obs_ph, acts, use_bf16), None


# --------------------------- deterministic params ---------------------------


def _linear_init(key, in_features, out_features):
    """PyTorch nn.Linear default init: U(-1/sqrt(fan_in), 1/sqrt(fan_in)).
    Weight returned pre-transposed to (in_features, out_features)."""
    bound = 1.0 / math.sqrt(in_features)
    kw, kb = jax.random.split(key)
    w = jax.random.uniform(kw, (in_features, out_features), jnp.float32, -bound, bound)
    b = jax.random.uniform(kb, (out_features,), jnp.float32, -bound, bound)
    return w, b


def make_params(key, obs_dim, act_dim, hidden=HIDDEN):
    in_dim = obs_dim + act_dim
    keys = jax.random.split(key, 5)
    w1, b1 = _linear_init(keys[0], in_dim, hidden)     # fc1
    w2, b2 = _linear_init(keys[1], hidden, hidden)     # fc2
    wq, bq = _linear_init(keys[2], hidden, 1)          # fc_q
    w3, b3 = _linear_init(keys[3], in_dim, hidden)     # fc3
    wqt, bqt = _linear_init(keys[4], hidden, 1)        # fc_qt
    return dict(
        w1=w1, b1=b1.reshape(1, hidden),
        w2=w2, b2=b2.reshape(1, hidden),
        wq=wq.T, bq=bq,                 # (1, hidden) row vector; (1,) SMEM scalar
        w3=w3, b3=b3.reshape(1, hidden),
        wqt=wqt.T, bqt=bqt,
    )


# ------------------------------ pure-JAX reference ---------------------------


def _reference(params, obs, acts, nobs=None, nacts=None):
    x = jnp.concatenate([obs, acts], axis=-1)
    h1 = jnp.maximum(x @ params["w1"] + params["b1"], 0.0)
    h2 = jnp.maximum(h1 @ params["w2"] + params["b2"], 0.0)
    q = h2 @ params["wq"].T + params["bq"]
    if nobs is None:
        return q, None
    xn = jnp.concatenate([nobs, nacts], axis=-1)
    h3 = jnp.maximum(xn @ params["w3"] + params["b3"], 0.0)
    qt = h3 @ params["wqt"].T + params["bqt"]
    return q, qt


# ---------------------------------- main -------------------------------------

if __name__ == "__main__":
    OBS_DIM, ACT_DIM = 16, 4

    root = jax.random.PRNGKey(0)
    kp, ko, ka, kno, kna = jax.random.split(root, 5)
    params = make_params(kp, OBS_DIM, ACT_DIM)

    # ---- small batch (single grid step) ----
    B = 8
    obs = jax.random.normal(ko, (B, OBS_DIM), jnp.float32)
    acts = jax.random.normal(ka, (B, ACT_DIM), jnp.float32)
    next_obs = jax.random.normal(kno, (B, OBS_DIM), jnp.float32)
    next_acts = jax.random.normal(kna, (B, ACT_DIM), jnp.float32)

    q_value, q_t = reward2_forward(params, obs, acts, next_obs, next_acts)
    jax.block_until_ready((q_value, q_t))
    q_ref, qt_ref = _reference(params, obs, acts, next_obs, next_acts)

    assert q_value.shape == (B, 1) and q_t.shape == (B, 1)
    assert jnp.allclose(q_value, q_ref, atol=1e-5, rtol=1e-5)
    assert jnp.allclose(q_t, qt_ref, atol=1e-5, rtol=1e-5)

    # ---- next_obs=None branch (q_t must be None) ----
    q_only, q_none = reward2_forward(params, obs, acts)
    jax.block_until_ready(q_only)
    assert q_none is None
    assert jnp.allclose(q_only, q_ref, atol=1e-5, rtol=1e-5)

    # ---- multi-tile batch: exercises 2-step grid, lane-dense out blocks,
    #      and the padded rows being sliced off ----
    B2 = 300
    ko2, ka2, kno2, kna2 = jax.random.split(jax.random.PRNGKey(1), 4)
    obs2 = jax.random.normal(ko2, (B2, OBS_DIM), jnp.float32)
    acts2 = jax.random.normal(ka2, (B2, ACT_DIM), jnp.float32)
    nobs2 = jax.random.normal(kno2, (B2, OBS_DIM), jnp.float32)
    nacts2 = jax.random.normal(kna2, (B2, ACT_DIM), jnp.float32)
    q2, qt2 = reward2_forward(params, obs2, acts2, nobs2, nacts2)
    jax.block_until_ready((q2, qt2))
    q2_ref, qt2_ref = _reference(params, obs2, acts2, nobs2, nacts2)
    assert q2.shape == (B2, 1) and qt2.shape == (B2, 1)
    assert jnp.allclose(q2, q2_ref, atol=1e-5, rtol=1e-5)
    assert jnp.allclose(qt2, qt2_ref, atol=1e-5, rtol=1e-5)

    # ---- optional bf16-MXU path (looser tolerance; accumulation stays fp32) ----
    qb, qtb = reward2_forward(params, obs, acts, next_obs, next_acts, use_bf16=True)
    jax.block_until_ready((qb, qtb))
    assert jnp.allclose(qb, q_ref, atol=1e-1, rtol=1e-1)
    assert jnp.allclose(qtb, qt_ref, atol=1e-1, rtol=1e-1)

    print("KERNEL_OK")
</pallas_src>

<mosaic_0001>
module attributes {stable_mosaic.version = 11 : i64} {
  func.func @_fused_kernel(%arg0: i32, %arg1: memref<8x20xf32, #tpu.memory_space<vmem>>, %arg2: memref<8x20xf32, #tpu.memory_space<vmem>>, %arg3: memref<20x256xf32, #tpu.memory_space<vmem>>, %arg4: memref<1x256xf32, #tpu.memory_space<vmem>>, %arg5: memref<256x256xf32, #tpu.memory_space<vmem>>, %arg6: memref<1x256xf32, #tpu.memory_space<vmem>>, %arg7: memref<1x256xf32, #tpu.memory_space<vmem>>, %arg8: memref<20x256xf32, #tpu.memory_space<vmem>>, %arg9: memref<1x256xf32, #tpu.memory_space<vmem>>, %arg10: memref<1x256xf32, #tpu.memory_space<vmem>>, %arg11: memref<1xf32, #tpu.memory_space<smem>>, %arg12: memref<1xf32, #tpu.memory_space<smem>>, %arg13: memref<2x8xf32, #tpu.memory_space<vmem>>) attributes {dimension_semantics = [#tpu.dimension_semantics<parallel>], iteration_bounds = array<i64: 1>, scalar_prefetch = 0 : i64, scratch_operands = 0 : i64, tpu.core_type = #tpu.core_type<tc>, window_params = [{transform_indices = @transform_0, window_bounds = array<i64: 8, 20>}, {transform_indices = @transform_1, window_bounds = array<i64: 8, 20>}, {pipeline_mode = #tpu.pipeline_mode<synchronous>, transform_indices = @transform_2, window_bounds = array<i64: 20, 256>}, {pipeline_mode = #tpu.pipeline_mode<synchronous>, transform_indices = @transform_3, window_bounds = array<i64: 1, 256>}, {pipeline_mode = #tpu.pipeline_mode<synchronous>, transform_indices = @transform_4, window_bounds = array<i64: 256, 256>}, {pipeline_mode = #tpu.pipeline_mode<synchronous>, transform_indices = @transform_5, window_bounds = array<i64: 1, 256>}, {pipeline_mode = #tpu.pipeline_mode<synchronous>, transform_indices = @transform_6, window_bounds = array<i64: 1, 256>}, {pipeline_mode = #tpu.pipeline_mode<synchronous>, transform_indices = @transform_7, window_bounds = array<i64: 20, 256>}, {pipeline_mode = #tpu.pipeline_mode<synchronous>, transform_indices = @transform_8, window_bounds = array<i64: 1, 256>}, {pipeline_mode = #tpu.pipeline_mode<synchronous>, transform_indices = @transform_9, window_bounds = array<i64: 1, 256>}, {transform_indices = @transform_10, window_bounds = array<i64: 1>}, {transform_indices = @transform_11, window_bounds = array<i64: 1>}, {transform_indices = @transform_12, window_bounds = array<i64: 2, 8>}]} {
    %c0 = arith.constant 0 : index
    %c0_0 = arith.constant 0 : index
    %0 = vector.load %arg1[%c0, %c0_0] : memref<8x20xf32, #tpu.memory_space<vmem>>, vector<8x20xf32>
    %c0_1 = arith.constant 0 : index
    %c0_2 = arith.constant 0 : index
    %1 = vector.load %arg3[%c0_1, %c0_2] : memref<20x256xf32, #tpu.memory_space<vmem>>, vector<20x256xf32>
    %cst = arith.constant dense<0.000000e+00> : vector<8x256xf32>
    %2 = tpu.matmul %0, %1, %cst {dimension_numbers = #tpu.dot_dimension_numbers<[1], [0], [0], [1], [0, 0, 1, 1], [], []>} : vector<8x20xf32>, vector<20x256xf32>, vector<8x256xf32> -> vector<8x256xf32>
    %c0_3 = arith.constant 0 : index
    %c0_4 = arith.constant 0 : index
    %3 = vector.load %arg4[%c0_3, %c0_4] : memref<1x256xf32, #tpu.memory_space<vmem>>, vector<1x256xf32>
    %4 = vector.broadcast %3 : vector<1x256xf32> to vector<8x256xf32>
    %5 = arith.addf %2, %4 : vector<8x256xf32>
    %cst_5 = arith.constant 0.000000e+00 : f32
    %6 = vector.broadcast %cst_5 : f32 to vector<8x256xf32>
    %7 = arith.maximumf %5, %6 : vector<8x256xf32>
    %c0_6 = arith.constant 0 : index
    %c0_7 = arith.constant 0 : index
    %8 = vector.load %arg5[%c0_6, %c0_7] : memref<256x256xf32, #tpu.memory_space<vmem>>, vector<256x256xf32>
    %cst_8 = arith.constant dense<0.000000e+00> : vector<8x256xf32>
    %9 = tpu.matmul %7, %8, %cst_8 {dimension_numbers = #tpu.dot_dimension_numbers<[1], [0], [0], [1], [0, 0, 1, 1], [], []>} : vector<8x256xf32>, vector<256x256xf32>, vector<8x256xf32> -> vector<8x256xf32>
    %c0_9 = arith.constant 0 : index
    %c0_10 = arith.constant 0 : index
    %10 = vector.load %arg6[%c0_9, %c0_10] : memref<1x256xf32, #tpu.memory_space<vmem>>, vector<1x256xf32>
    %11 = vector.broadcast %10 : vector<1x256xf32> to vector<8x256xf32>
    %12 = arith.addf %9, %11 : vector<8x256xf32>
    %cst_11 = arith.constant 0.000000e+00 : f32
    %13 = vector.broadcast %cst_11 : f32 to vector<8x256xf32>
    %14 = arith.maximumf %12, %13 : vector<8x256xf32>
    %c0_12 = arith.constant 0 : index
    %c0_13 = arith.constant 0 : index
    %15 = vector.load %arg7[%c0_12, %c0_13] : memref<1x256xf32, #tpu.memory_space<vmem>>, vector<1x256xf32>
    %16 = vector.broadcast %15 : vector<1x256xf32> to vector<8x256xf32>
    %17 = arith.mulf %14, %16 : vector<8x256xf32>
    %cst_14 = arith.constant dense<0.000000e+00> : vector<8xf32>
    %18 = vector.multi_reduction <add>, %17, %cst_14 [1] : vector<8x256xf32> to vector<8xf32>
    %c0_15 = arith.constant 0 : index
    %19 = memref.load %arg11[%c0_15] : memref<1xf32, #tpu.memory_space<smem>>
    %20 = vector.broadcast %19 : f32 to vector<8xf32>
    %21 = arith.addf %18, %20 : vector<8xf32>
    %c0_16 = arith.constant 0 : index
    %c0_17 = arith.constant 0 : index
    %22 = vector.load %arg2[%c0_16, %c0_17] : memref<8x20xf32, #tpu.memory_space<vmem>>, vector<8x20xf32>
    %c0_18 = arith.constant 0 : index
    %c0_19 = arith.constant 0 : index
    %23 = vector.load %arg8[%c0_18, %c0_19] : memref<20x256xf32, #tpu.memory_space<vmem>>, vector<20x256xf32>
    %cst_20 = arith.constant dense<0.000000e+00> : vector<8x256xf32>
    %24 = tpu.matmul %22, %23, %cst_20 {dimension_numbers = #tpu.dot_dimension_numbers<[1], [0], [0], [1], [0, 0, 1, 1], [], []>} : vector<8x20xf32>, vector<20x256xf32>, vector<8x256xf32> -> vector<8x256xf32>
    %c0_21 = arith.constant 0 : index
    %c0_22 = arith.constant 0 : index
    %25 = vector.load %arg9[%c0_21, %c0_22] : memref<1x256xf32, #tpu.memory_space<vmem>>, vector<1x256xf32>
    %26 = vector.broadcast %25 : vector<1x256xf32> to vector<8x256xf32>
    %27 = arith.addf %24, %26 : vector<8x256xf32>
    %cst_23 = arith.constant 0.000000e+00 : f32
    %28 = vector.broadcast %cst_23 : f32 to vector<8x256xf32>
    %29 = arith.maximumf %27, %28 : vector<8x256xf32>
    %c0_24 = arith.constant 0 : index
    %c0_25 = arith.constant 0 : index
    %30 = vector.load %arg10[%c0_24, %c0_25] : memref<1x256xf32, #tpu.memory_space<vmem>>, vector<1x256xf32>
    %31 = vector.broadcast %30 : vector<1x256xf32> to vector<8x256xf32>
    %32 = arith.mulf %29, %31 : vector<8x256xf32>
    %cst_26 = arith.constant dense<0.000000e+00> : vector<8xf32>
    %33 = vector.multi_reduction <add>, %32, %cst_26 [1] : vector<8x256xf32> to vector<8xf32>
    %c0_27 = arith.constant 0 : index
    %34 = memref.load %arg12[%c0_27] : memref<1xf32, #tpu.memory_space<smem>>
    %35 = vector.broadcast %34 : f32 to vector<8xf32>
    %36 = arith.addf %33, %35 : vector<8xf32>
    %37 = vector.shape_cast %21 : vector<8xf32> to vector<1x8xf32>
    %38 = vector.shape_cast %36 : vector<8xf32> to vector<1x8xf32>
    %39 = tpu.concatenate %37, %38 in 0 : vector<1x8xf32>, vector<1x8xf32> -> vector<2x8xf32>
    %c0_28 = arith.constant 0 : index
    %c0_29 = arith.constant 0 : index
    %40 = vector.load %arg13[%c0_28, %c0_29] : memref<2x8xf32, #tpu.memory_space<vmem>>, vector<2x8xf32>
    tpu.vector_store %arg13[%c0_28, %c0_29], %39 {strides = array<i32>} : memref<2x8xf32, #tpu.memory_space<vmem>>, vector<2x8xf32>,
    return
  }
  func.func @transform_0(%arg0: i32) -> (i32, i32) {
    %c0_i32 = arith.constant 0 : i32
    %c0_i32_0 = arith.constant 0 : i32
    return %arg0, %c0_i32 : i32, i32
  }
  func.func @transform_1(%arg0: i32) -> (i32, i32) {
    %c0_i32 = arith.constant 0 : i32
    %c0_i32_0 = arith.constant 0 : i32
    return %arg0, %c0_i32 : i32, i32
  }
  func.func @transform_2(%arg0: i32) -> (i32, i32) {
    %c0_i32 = arith.constant 0 : i32
    %c0_i32_0 = arith.constant 0 : i32
    %c0_i32_1 = arith.constant 0 : i32
    return %c0_i32, %c0_i32_0 : i32, i32
  }
  func.func @transform_3(%arg0: i32) -> (i32, i32) {
    %c0_i32 = arith.constant 0 : i32
    %c0_i32_0 = arith.constant 0 : i32
    %c0_i32_1 = arith.constant 0 : i32
    return %c0_i32, %c0_i32_0 : i32, i32
  }
  func.func @transform_4(%arg0: i32) -> (i32, i32) {
    %c0_i32 = arith.constant 0 : i32
    %c0_i32_0 = arith.constant 0 : i32
    %c0_i32_1 = arith.constant 0 : i32
    return %c0_i32, %c0_i32_0 : i32, i32
  }
  func.func @transform_5(%arg0: i32) -> (i32, i32) {
    %c0_i32 = arith.constant 0 : i32
    %c0_i32_0 = arith.constant 0 : i32
    %c0_i32_1 = arith.constant 0 : i32
    return %c0_i32, %c0_i32_0 : i32, i32
  }
  func.func @transform_6(%arg0: i32) -> (i32, i32) {
    %c0_i32 = arith.constant 0 : i32
    %c0_i32_0 = arith.constant 0 : i32
    %c0_i32_1 = arith.constant 0 : i32
    return %c0_i32, %c0_i32_0 : i32, i32
  }
  func.func @transform_7(%arg0: i32) -> (i32, i32) {
    %c0_i32 = arith.constant 0 : i32
    %c0_i32_0 = arith.constant 0 : i32
    %c0_i32_1 = arith.constant 0 : i32
    return %c0_i32, %c0_i32_0 : i32, i32
  }
  func.func @transform_8(%arg0: i32) -> (i32, i32) {
    %c0_i32 = arith.constant 0 : i32
    %c0_i32_0 = arith.constant 0 : i32
    %c0_i32_1 = arith.constant 0 : i32
    return %c0_i32, %c0_i32_0 : i32, i32
  }
  func.func @transform_9(%arg0: i32) -> (i32, i32) {
    %c0_i32 = arith.constant 0 : i32
    %c0_i32_0 = arith.constant 0 : i32
    %c0_i32_1 = arith.constant 0 : i32
    return %c0_i32, %c0_i32_0 : i32, i32
  }
  func.func @transform_10(%arg0: i32) -> i32 {
    %c0_i32 = arith.constant 0 : i32
    %c0_i32_0 = arith.constant 0 : i32
    return %c0_i32 : i32
  }
  func.func @transform_11(%arg0: i32) -> i32 {
    %c0_i32 = arith.constant 0 : i32
    %c0_i32_0 = arith.constant 0 : i32
    return %c0_i32 : i32
  }
  func.func @transform_12(%arg0: i32) -> (i32, i32) {
    %c0_i32 = arith.constant 0 : i32
    %c0_i32_0 = arith.constant 0 : i32
    return %c0_i32, %arg0 : i32, i32
  }
}

</mosaic_0001>

<llo_original>
// kernel: tpu_custom_call.1
$region0: #{tpu_custom_call.1}
  #allocation0 [shape = 'u32[]', space=smem, size = 0x4, offset = 0x4, fixed_abs, tag = 'smem constant byte address 0x4 - core index']
  #allocation1 [shape = 'u32[144,128]{1,0:T(1,128)}', space=vmem, size = 0x12000, scoped, tag = 'internal scratch']
  #allocation2 [shape = 'f32[1]{0:T(128)S(6)}', space=smem, size = 0x200, scoped, tag = 'scoped memory for tpu_custom_call.1']
  #allocation3 [shape = 'f32[1]{0:T(128)S(6)}', space=smem, size = 0x200, scoped, tag = 'scoped memory for tpu_custom_call.1']
  %s0 = inlined_call_operand.hbm [shape: f32[8,20], index: 0, kind: input, shape index: {}]
  %s1 = inlined_call_operand.vmem [shape: f32[8,20], index: 1, kind: input, shape index: {}]
  %s2 = inlined_call_operand.hbm [shape: f32[20,256], index: 2, kind: input, shape index: {}]
  %s3 = inlined_call_operand.vmem [shape: f32[1,256], index: 3, kind: input, shape index: {}]
  %s4 = inlined_call_operand.hbm [shape: f32[256,256], index: 4, kind: input, shape index: {}]
  %s5 = inlined_call_operand.vmem [shape: f32[1,256], index: 5, kind: input, shape index: {}]
  %s6 = inlined_call_operand.vmem [shape: f32[1,256], index: 6, kind: input, shape index: {}]
  %s7 = inlined_call_operand.hbm [shape: f32[20,256], index: 7, kind: input, shape index: {}]
  %s8 = inlined_call_operand.vmem [shape: f32[1,256], index: 8, kind: input, shape index: {}]
  %s9 = inlined_call_operand.vmem [shape: f32[1,256], index: 9, kind: input, shape index: {}]
  %s10 = inlined_call_operand.<no memory space> [shape: f32[1], index: 10, kind: input, shape index: {}]
  %s11 = inlined_call_operand.<no memory space> [shape: f32[1], index: 11, kind: input, shape index: {}]
  %s12 = inlined_call_operand.hbm [shape: f32[2,8], index: 12, kind: output, shape index: {}]
  %s13 = sld [smem:[#allocation0]]
  $region74: #{tpu_custom_call.1} parent=0
    _
  %s15 = ssub.s32 1, %s13
  %s16 = scalar_select 0, %s15, %s13
  %17 = sst [smem:[#allocation2]] %s10
  %18 = sst [smem:[#allocation3]] %s11
  $region1: #{tpu_custom_call.1} parent=0
    #allocation4 [shape = 'u8[4096]{0}', space=vmem, size = 0x1000, scoped, tag = 'input window, operand 0, single buffered']
    #allocation5 [shape = 's32[1]{0}', space=sflag, size = 0x4, scoped, tag = 'scoped memory for tpu_custom_call.1']
    #allocation6 [shape = 's32[1]{0}', space=sflag, size = 0x4, scoped, tag = 'scoped memory for tpu_custom_call.1']
    #allocation7 [shape = 'u8[24576]{0}', space=vmem, size = 0x6000, scoped, tag = 'input window, operand 2, single buffered']
    #allocation8 [shape = 's32[1]{0}', space=sflag, size = 0x4, scoped, tag = 'scoped memory for tpu_custom_call.1']
    #allocation9 [shape = 'u8[262144]{0}', space=vmem, size = 0x40000, scoped, tag = 'input window, operand 4, single buffered']
    #allocation10 [shape = 'u8[24576]{0}', space=vmem, size = 0x6000, scoped, tag = 'input window, operand 7, single buffered']
    #allocation11 [shape = 's32[1]{0}', space=sflag, size = 0x4, scoped, tag = 'scoped memory for tpu_custom_call.1']
    #allocation12 [shape = 'u8[1024]{0}', space=vmem, size = 0x400, scoped, tag = 'output window, operand 0, single buffered']
    %19 = vsyncpa [#allocation5], 0
    %20 = vsyncpa [#allocation8], 0
    %21 = vsyncpa [#allocation11], 0
    %22 = vsyncpa [#allocation6], 0
    // Predicated region
    $region2: #{tpu_custom_call.1} parent=1 // pred_check
      _
    $region3: #{tpu_custom_call.1} parent=1 // pred_check_branch
      %24 = sbr.rel (0) target = $region5
    $region4: #{tpu_custom_call.1} parent=1 // pred_region
      %s26 = ssub.s32 128, 128
      %27 = vsyncadd [#allocation5], %s26
      %s29 = sshll.u32 [#allocation4], 4
      %s30 = int_to_ptr.vmem [resolvable:$true] %s29
      %32 = dma.hbm_to_vmem [thread:$0]  %s0, 128, %s30, [#allocation5]
    $region5: #{tpu_custom_call.1} parent=1 // pred_fallthru
      _
    // Predicated region
    $region6: #{tpu_custom_call.1} parent=1 // pred_check
      _
    $region7: #{tpu_custom_call.1} parent=1 // pred_check_branch
      %34 = sbr.rel (0) target = $region9
    $region8: #{tpu_custom_call.1} parent=1 // pred_region
      _
    $region9: #{tpu_custom_call.1} parent=1 // pred_fallthru
      _
    // Predicated region
    $region10: #{tpu_custom_call.1} parent=1 // pred_check
      _
    $region11: #{tpu_custom_call.1} parent=1 // pred_check_branch
      %36 = sbr.rel (0) target = $region13
    $region12: #{tpu_custom_call.1} parent=1 // pred_region
      %s38 = ssub.s32 768, 768
      %39 = vsyncadd [#allocation8], %s38
      %s40 = sshll.u32 [#allocation7], 4
      %s41 = int_to_ptr.vmem [resolvable:$true] %s40
      %46 = dma.hbm_to_vmem [thread:$0]  %s2, 768, %s41, [#allocation8], 256, 256, 16
    $region13: #{tpu_custom_call.1} parent=1 // pred_fallthru
      _
    // Predicated region
    $region14: #{tpu_custom_call.1} parent=1 // pred_check
      _
    $region15: #{tpu_custom_call.1} parent=1 // pred_check_branch
      %48 = sbr.rel (0) target = $region17
    $region16: #{tpu_custom_call.1} parent=1 // pred_region
      _
    $region17: #{tpu_custom_call.1} parent=1 // pred_fallthru
      _
    // Predicated region
    $region18: #{tpu_custom_call.1} parent=1 // pred_check
      _
    $region19: #{tpu_custom_call.1} parent=1 // pred_check_branch
      %50 = sbr.rel (0) target = $region21
    $region20: #{tpu_custom_call.1} parent=1 // pred_region
      %s52 = ssub.s32 8192, 8192
      %53 = vsyncadd [#allocation8], %s52
      %s54 = sshll.u32 [#allocation9], 4
      %s55 = int_to_ptr.vmem [resolvable:$true] %s54
      %60 = dma.hbm_to_vmem [thread:$0]  %s4, 8192, %s55, [#allocation8], 256, 256, 16
    $region21: #{tpu_custom_call.1} parent=1 // pred_fallthru
      _
    // Predicated region
    $region22: #{tpu_custom_call.1} parent=1 // pred_check
      _
    $region23: #{tpu_custom_call.1} parent=1 // pred_check_branch
      %62 = sbr.rel (0) target = $region25
    $region24: #{tpu_custom_call.1} parent=1 // pred_region
      _
    $region25: #{tpu_custom_call.1} parent=1 // pred_fallthru
      _
    // Predicated region
    $region26: #{tpu_custom_call.1} parent=1 // pred_check
      _
    $region27: #{tpu_custom_call.1} parent=1 // pred_check_branch
      %64 = sbr.rel (0) target = $region29
    $region28: #{tpu_custom_call.1} parent=1 // pred_region
      _
    $region29: #{tpu_custom_call.1} parent=1 // pred_fallthru
      _
    // Predicated region
    $region30: #{tpu_custom_call.1} parent=1 // pred_check
      _
    $region31: #{tpu_custom_call.1} parent=1 // pred_check_branch
      %66 = sbr.rel (0) target = $region33
    $region32: #{tpu_custom_call.1} parent=1 // pred_region
      %s68 = ssub.s32 768, 768
      %69 = vsyncadd [#allocation11], %s68
      %s70 = sshll.u32 [#allocation10], 4
      %s71 = int_to_ptr.vmem [resolvable:$true] %s70
      %76 = dma.hbm_to_vmem [thread:$0]  %s7, 768, %s71, [#allocation11], 256, 256, 16
    $region33: #{tpu_custom_call.1} parent=1 // pred_fallthru
      _
    // Predicated region
    $region34: #{tpu_custom_call.1} parent=1 // pred_check
      _
    $region35: #{tpu_custom_call.1} parent=1 // pred_check_branch
      %78 = sbr.rel (0) target = $region37
    $region36: #{tpu_custom_call.1} parent=1 // pred_region
      _
    $region37: #{tpu_custom_call.1} parent=1 // pred_fallthru
      _
    // Predicated region
    $region38: #{tpu_custom_call.1} parent=1 // pred_check
      _
    $region39: #{tpu_custom_call.1} parent=1 // pred_check_branch
      %80 = sbr.rel (0) target = $region41
    $region40: #{tpu_custom_call.1} parent=1 // pred_region
      _
    $region41: #{tpu_custom_call.1} parent=1 // pred_fallthru
      _
    // Predicated region
    $region42: #{tpu_custom_call.1} parent=1 // pred_check
      _
    $region43: #{tpu_custom_call.1} parent=1 // pred_check_branch
      %82 = sbr.rel (0) target = $region45
    $region44: #{tpu_custom_call.1} parent=1 // pred_region
      _
    $region45: #{tpu_custom_call.1} parent=1 // pred_fallthru
      _
    // Predicated region
    $region46: #{tpu_custom_call.1} parent=1 // pred_check
      _
    $region47: #{tpu_custom_call.1} parent=1 // pred_check_branch
      %84 = sbr.rel (0) target = $region49
    $region48: #{tpu_custom_call.1} parent=1 // pred_region
      _
    $region49: #{tpu_custom_call.1} parent=1 // pred_fallthru
      _
    // Predicated region
    $region50: #{tpu_custom_call.1} parent=1 // pred_check
      _
    $region51: #{tpu_custom_call.1} parent=1 // pred_check_branch
      %86 = sbr.rel (0) target = $region53
    $region52: #{tpu_custom_call.1} parent=1 // pred_region
      %87 = dma.done [#allocation5], 128
    $region53: #{tpu_custom_call.1} parent=1 // pred_fallthru
      _
    // Predicated region
    $region54: #{tpu_custom_call.1} parent=1 // pred_check
      _
    $region55: #{tpu_custom_call.1} parent=1 // pred_check_branch
      %89 = sbr.rel (0) target = $region57
    $region56: #{tpu_custom_call.1} parent=1 // pred_region
      %90 = dma.done [#allocation8], 768
    $region57: #{tpu_custom_call.1} parent=1 // pred_fallthru
      _
    // Predicated region
    $region58: #{tpu_custom_call.1} parent=1 // pred_check
      _
    $region59: #{tpu_custom_call.1} parent=1 // pred_check_branch
      %92 = sbr.rel (0) target = $region61
    $region60: #{tpu_custom_call.1} parent=1 // pred_region
      %93 = dma.done [#allocation8], 8192
    $region61: #{tpu_custom_call.1} parent=1 // pred_fallthru
      _
    // Predicated region
    $region62: #{tpu_custom_call.1} parent=1 // pred_check
      _
    $region63: #{tpu_custom_call.1} parent=1 // pred_check_branch
      %95 = sbr.rel (0) target = $region65
    $region64: #{tpu_custom_call.1} parent=1 // pred_region
      %96 = dma.done [#allocation11], 768
    $region65: #{tpu_custom_call.1} parent=1 // pred_fallthru
      _
    %v97 = vld [vmem:[#allocation4] sm:$0xff]
    %v98 = vld [vmem:[#allocation7] sm:$0xff]
    %v99 = vld [vmem:[#allocation7 + $0x8] sm:$0xff]
    %v100 = vld [vmem:[#allocation7 + $0x10] sm:$0xff]
    %v101 = vld [vmem:[#allocation7 + $0x18] sm:$0xff]
    %v102 = vld [vmem:[#allocation7 + $0x20] sm:$0xf]
    %v103 = vld [vmem:[#allocation7 + $0x28] sm:$0xf]
    %v104 = vld [vmem:[%s3] sm:$0x3]
    %v106 = vlaneseq
    %v107 = vshrl.u32 %v106, 7
    %v108 = vsub.s32 0, %v107
    %v109 = vrot.slane %v104, %v108
    %v110 = vlaneseq
    %v111 = vshrl.u32 %v110, 7
    %v112 = vsub.s32 1, %v111
    %v113 = vrot.slane %v104, %v112
    %vm116 = vcmask 162816
    %v118 = vsel %vm116, %v97, 0
    %vm120 = vcmask 1043456
    %v122 = vsel %vm120, %v102, 0
    %v125 = vsel %vm120, %v103, 0
    %127 = vmatprep.subr.mxu0 %v99
    %128 = vmatpush1.msra.mxu0 %v98
    %129 = vmatprep.subr.mxu0 %v101
    %130 = vmatpush1.msra.mxu0 %v100
    %131 = vmatprep.subr.mxu0 %v125
    %132 = vmatpush1.msra.mxu0 %v122
    %133 = vmatprep.subr.mxu0 0.0
    %134 = vmatpush1.msra.mxu0 0.0
    %135 = vmatprep.subr.mxu0 0.0
    %136 = vmatpush1.msra.mxu0 0.0
    %137 = vmatprep.subr.mxu0 0.0
    %138 = vmatpush1.msra.mxu0 0.0
    %139 = vmatprep.subr.mxu0 0.0
    %140 = vmatpush1.msra.mxu0 0.0
    %141 = vmatprep.subr.mxu0 0.0
    %142 = vmatpush1.msra.mxu0 0.0
    %143 = vmatprep.subr.mxu0 0.0
    %144 = vmatpush1.msra.mxu0 0.0
    %145 = vmatprep.subr.mxu0 0.0
    %146 = vmatpush1.msra.mxu0 0.0
    %147 = vmatprep.subr.mxu0 0.0
    %148 = vmatpush1.msra.mxu0 0.0
    %149 = vmatprep.subr.mxu0 0.0
    %150 = vmatpush1.msra.mxu0 0.0
    %151 = vmatprep.subr.mxu0 0.0
    %152 = vmatpush1.msra.mxu0 0.0
    %153 = vmatprep.subr.mxu0 0.0
    %154 = vmatpush1.msra.mxu0 0.0
    %155 = vmatprep.subr.mxu0 0.0
    %156 = vmatpush1.msra.mxu0 0.0
    %157 = vmatprep.subr.mxu0 0.0
    %158 = vmatpush1.msra.mxu0 0.0
    %159 = vmatprep.subr.mxu0 0.0
    %160 = vmatpush1.msra.mxu0 0.0
    %161 = vmatprep.subr.mxu0 0.0
    %162 = vmatpush1.msra.mxu0 0.0
    %163 = vmatprep.subr.mxu0 0.0
    %164 = vmatpush1.msra.mxu0 0.0
    %165 = vmatprep.subr.mxu0 0.0
    %166 = vmatpush1.msra.mxu0 0.0
    %167 = vmatprep.subr.mxu0 0.0
    %168 = vmatpush1.msra.mxu0 0.0
    %169 = vmatprep.subr.mxu0 0.0
    %170 = vmatpush1.msra.mxu0 0.0
    %171 = vmatprep.subr.mxu0 0.0
    %172 = vmatpush1.msra.mxu0 0.0
    %173 = vmatprep.subr.mxu0 0.0
    %174 = vmatpush1.msra.mxu0 0.0
    %175 = vmatprep.subr.mxu0 0.0
    %176 = vmatpush1.msra.mxu0 0.0
    %177 = vmatprep.subr.mxu0 0.0
    %178 = vmatpush1.msra.mxu0 0.0
    %179 = vmatprep.subr.mxu0 0.0
    %180 = vmatpush1.msra.mxu0 0.0
    %181 = vmatprep.subr.mxu0 0.0
    %182 = vmatpush1.msra.mxu0 0.0
    %183 = vmatprep.subr.mxu0 0.0
    %184 = vmatpush1.msra.mxu0 0.0
    %185 = vmatprep.subr.mxu0 0.0
    %186 = vmatpush1.msra.mxu0 0.0
    %187 = vmatprep.subr.mxu0 0.0
    %188 = vmatpush1.msra.mxu0 0.0
    %189 = vmatprep.subr.mxu0 0.0
    %190 = vmatpush1.msra.mxu0 0.0
    %191 = vmatprep.mubr.f32.mxu0 0.0
    %192 = vmatmul.mubr.f32.gmra.mrb[0].mxu0 %v118
    %v193 = vpop.f32.mrb[0].mxu0
    %v194 = vadd.f32 %v109, %v193
    %v195 = vpop.f32.mrb[0].mxu0
    %v196 = vadd.f32 %v113, %v195
    %197 = vdwg.mxu0
    %v198 = vmax.f32 %v194, 0.0
    %v199 = vmax.f32 %v196, 0.0
    %v200 = vld [vmem:[#allocation9] sm:$0xff]
    %v201 = vld [vmem:[#allocation9 + $0x8] sm:$0xff]
    %v202 = vld [vmem:[#allocation9 + $0x10] sm:$0xff]
    %v203 = vld [vmem:[#allocation9 + $0x18] sm:$0xff]
    %v204 = vld [vmem:[#allocation9 + $0x20] sm:$0xff]
    %v205 = vld [vmem:[#allocation9 + $0x28] sm:$0xff]
    %v206 = vld [vmem:[#allocation9 + $0x30] sm:$0xff]
    %v207 = vld [vmem:[#allocation9 + $0x38] sm:$0xff]
    %v208 = vld [vmem:[#allocation9 + $0x40] sm:$0xff]
    %v209 = vld [vmem:[#allocation9 + $0x48] sm:$0xff]
    %v210 = vld [vmem:[#allocation9 + $0x50] sm:$0xff]
    %v211 = vld [vmem:[#allocation9 + $0x58] sm:$0xff]
    %v212 = vld [vmem:[#allocation9 + $0x60] sm:$0xff]
    %v213 = vld [vmem:[#allocation9 + $0x68] sm:$0xff]
    %v214 = vld [vmem:[#allocation9 + $0x70] sm:$0xff]
    %v215 = vld [vmem:[#allocation9 + $0x78] sm:$0xff]
    %v216 = vld [vmem:[#allocation9 + $0x80] sm:$0xff]
    %v217 = vld [vmem:[#allocation9 + $0x88] sm:$0xff]
    %v218 = vld [vmem:[#allocation9 + $0x90] sm:$0xff]
    %v219 = vld [vmem:[#allocation9 + $0x98] sm:$0xff]
    %v220 = vld [vmem:[#allocation9 + $0xa0] sm:$0xff]
    %v221 = vld [vmem:[#allocation9 + $0xa8] sm:$0xff]
    %v222 = vld [vmem:[#allocation9 + $0xb0] sm:$0xff]
    %v223 = vld [vmem:[#allocation9 + $0xb8] sm:$0xff]
    %v224 = vld [vmem:[#allocation9 + $0xc0] sm:$0xff]
    %v225 = vld [vmem:[#allocation9 + $0xc8] sm:$0xff]
    %v226 = vld [vmem:[#allocation9 + $0xd0] sm:$0xff]
    %v227 = vld [vmem:[#allocation9 + $0xd8] sm:$0xff]
    %v228 = vld [vmem:[#allocation9 + $0xe0] sm:$0xff]
    %v229 = vld [vmem:[#allocation9 + $0xe8] sm:$0xff]
    %v230 = vld [vmem:[#allocation9 + $0xf0] sm:$0xff]
    %v231 = vld [vmem:[#allocation9 + $0xf8] sm:$0xff]
    %v232 = vld [vmem:[#allocation9 + $0x100] sm:$0xff]
    %v233 = vld [vmem:[#allocation9 + $0x108] sm:$0xff]
    %v234 = vld [vmem:[#allocation9 + $0x110] sm:$0xff]
    %v235 = vld [vmem:[#allocation9 + $0x118] sm:$0xff]
    %v236 = vld [vmem:[#allocation9 + $0x120] sm:$0xff]
    %v237 = vld [vmem:[#allocation9 + $0x128] sm:$0xff]
    %v238 = vld [vmem:[#allocation9 + $0x130] sm:$0xff]
    %v239 = vld [vmem:[#allocation9 + $0x138] sm:$0xff]
    %v240 = vld [vmem:[#allocation9 + $0x140] sm:$0xff]
    %v241 = vld [vmem:[#allocation9 + $0x148] sm:$0xff]
    %v242 = vld [vmem:[#allocation9 + $0x150] sm:$0xff]
    %v243 = vld [vmem:[#allocation9 + $0x158] sm:$0xff]
    %v244 = vld [vmem:[#allocation9 + $0x160] sm:$0xff]
    %v245 = vld [vmem:[#allocation9 + $0x168] sm:$0xff]
    %v246 = vld [vmem:[#allocation9 + $0x170] sm:$0xff]
    %v247 = vld [vmem:[#allocation9 + $0x178] sm:$0xff]
    %v248 = vld [vmem:[#allocation9 + $0x180] sm:$0xff]
    %v249 = vld [vmem:[#allocation9 + $0x188] sm:$0xff]
    %v250 = vld [vmem:[#allocation9 + $0x190] sm:$0xff]
    %v251 = vld [vmem:[#allocation9 + $0x198] sm:$0xff]
    %v252 = vld [vmem:[#allocation9 + $0x1a0] sm:$0xff]
    %v253 = vld [vmem:[#allocation9 + $0x1a8] sm:$0xff]
    %v254 = vld [vmem:[#allocation9 + $0x1b0] sm:$0xff]
    %v255 = vld [vmem:[#allocation9 + $0x1b8] sm:$0xff]
    %v256 = vld [vmem:[#allocation9 + $0x1c0] sm:$0xff]
    %v257 = vld [vmem:[#allocation9 + $0x1c8] sm:$0xff]
    %v258 = vld [vmem:[#allocation9 + $0x1d0] sm:$0xff]
    %v259 = vld [vmem:[#allocation9 + $0x1d8] sm:$0xff]
    %v260 = vld [vmem:[#allocation9 + $0x1e0] sm:$0xff]
    %v261 = vld [vmem:[#allocation9 + $0x1e8] sm:$0xff]
    %v262 = vld [vmem:[#allocation9 + $0x1f0] sm:$0xff]
    %v263 = vld [vmem:[#allocation9 + $0x1f8] sm:$0xff]
    %v264 = vld [vmem:[%s5] sm:$0x3]
    %v266 = vlaneseq
    %v267 = vshrl.u32 %v266, 7
    %v268 = vsub.s32 0, %v267
    %v269 = vrot.slane %v264, %v268
    %v270 = vlaneseq
    %v271 = vshrl.u32 %v270, 7
    %v272 = vsub.s32 1, %v271
    %v273 = vrot.slane %v264, %v272
    %276 = vmatprep.subr.mxu0 %v201
    %277 = vmatpush1.msra.mxu0 %v200
    %278 = vmatprep.subr.mxu0 %v203
    %279 = vmatpush1.msra.mxu0 %v202
    %280 = vmatprep.subr.mxu0 %v205
    %281 = vmatpush1.msra.mxu0 %v204
    %282 = vmatprep.subr.mxu0 %v207
    %283 = vmatpush1.msra.mxu0 %v206
    %284 = vmatprep.subr.mxu0 %v209
    %285 = vmatpush1.msra.mxu0 %v208
    %286 = vmatprep.subr.mxu0 %v211
    %287 = vmatpush1.msra.mxu0 %v210
    %288 = vmatprep.subr.mxu0 %v213
    %289 = vmatpush1.msra.mxu0 %v212
    %290 = vmatprep.subr.mxu0 %v215
    %291 = vmatpush1.msra.mxu0 %v214
    %292 = vmatprep.subr.mxu0 %v217
    %293 = vmatpush1.msra.mxu0 %v216
    %294 = vmatprep.subr.mxu0 %v219
    %295 = vmatpush1.msra.mxu0 %v218
    %296 = vmatprep.subr.mxu0 %v221
    %297 = vmatpush1.msra.mxu0 %v220
    %298 = vmatprep.subr.mxu0 %v223
    %299 = vmatpush1.msra.mxu0 %v222
    %300 = vmatprep.subr.mxu0 %v225
    %301 = vmatpush1.msra.mxu0 %v224
    %302 = vmatprep.subr.mxu0 %v227
    %303 = vmatpush1.msra.mxu0 %v226
    %304 = vmatprep.subr.mxu0 %v229
    %305 = vmatpush1.msra.mxu0 %v228
    %306 = vmatprep.subr.mxu0 %v231
    %307 = vmatpush1.msra.mxu0 %v230
    %308 = vmatprep.subr.mxu0 %v233
    %309 = vmatpush1.msra.mxu0 %v232
    %310 = vmatprep.subr.mxu0 %v235
    %311 = vmatpush1.msra.mxu0 %v234
    %312 = vmatprep.subr.mxu0 %v237
    %313 = vmatpush1.msra.mxu0 %v236
    %314 = vmatprep.subr.mxu0 %v239
    %315 = vmatpush1.msra.mxu0 %v238
    %316 = vmatprep.subr.mxu0 %v241
    %317 = vmatpush1.msra.mxu0 %v240
    %318 = vmatprep.subr.mxu0 %v243
    %319 = vmatpush1.msra.mxu0 %v242
    %320 = vmatprep.subr.mxu0 %v245
    %321 = vmatpush1.msra.mxu0 %v244
    %322 = vmatprep.subr.mxu0 %v247
    %323 = vmatpush1.msra.mxu0 %v246
    %324 = vmatprep.subr.mxu0 %v249
    %325 = vmatpush1.msra.mxu0 %v248
    %326 = vmatprep.subr.mxu0 %v251
    %327 = vmatpush1.msra.mxu0 %v250
    %328 = vmatprep.subr.mxu0 %v253
    %329 = vmatpush1.msra.mxu0 %v252
    %330 = vmatprep.subr.mxu0 %v255
    %331 = vmatpush1.msra.mxu0 %v254
    %332 = vmatprep.subr.mxu0 %v257
    %333 = vmatpush1.msra.mxu0 %v256
    %334 = vmatprep.subr.mxu0 %v259
    %335 = vmatpush1.msra.mxu0 %v258
    %336 = vmatprep.subr.mxu0 %v261
    %337 = vmatpush1.msra.mxu0 %v260
    %338 = vmatprep.subr.mxu0 %v263
    %339 = vmatpush1.msra.mxu0 %v262
    %340 = vmatprep.mubr.f32.mxu0 %v199
    %341 = vmatmul.mubr.f32.gmra.mrb[0].mxu0 %v198
    %v342 = vpop.f32.mrb[0].mxu0
    %v343 = vadd.f32 %v269, %v342
    %v344 = vpop.f32.mrb[0].mxu0
    %v345 = vadd.f32 %v273, %v344
    %346 = vdwg.mxu0
    %v347 = vmax.f32 %v343, 0.0
    %v348 = vmax.f32 %v345, 0.0
    %v349 = vld [vmem:[%s6] sm:$0x3]
    %v351 = vlaneseq
    %v352 = vshrl.u32 %v351, 7
    %v353 = vsub.s32 0, %v352
    %v354 = vrot.slane %v349, %v353
    %v355 = vlaneseq
    %v356 = vshrl.u32 %v355, 7
    %v357 = vsub.s32 1, %v356
    %v358 = vrot.slane %v349, %v357
    %v361 = vmul.f32 %v347, %v354
    %v362 = vmul.f32 %v348, %v358
    %v363 = vadd.f32 %v361, %v362
    %364 = vadd.xlane.f32.xlu0 %v363
    %v365 = vpop.xlane.xlu0 %364
    %s366 = sld [smem:[#allocation2]]
    %v367 = vstv %s366
    %v368 = vadd.f32 %v365, %v367
    %v369 = vld [vmem:[%s1] sm:$0xff]
    %v370 = vld [vmem:[#allocation10] sm:$0xff]
    %v371 = vld [vmem:[#allocation10 + $0x8] sm:$0xff]
    %v372 = vld [vmem:[#allocation10 + $0x10] sm:$0xff]
    %v373 = vld [vmem:[#allocation10 + $0x18] sm:$0xff]
    %v374 = vld [vmem:[#allocation10 + $0x20] sm:$0xf]
    %v375 = vld [vmem:[#allocation10 + $0x28] sm:$0xf]
    %v376 = vld [vmem:[%s8] sm:$0x3]
    %v378 = vlaneseq
    %v379 = vshrl.u32 %v378, 7
    %v380 = vsub.s32 0, %v379
    %v381 = vrot.slane %v376, %v380
    %v382 = vlaneseq
    %v383 = vshrl.u32 %v382, 7
    %v384 = vsub.s32 1, %v383
    %v385 = vrot.slane %v376, %v384
    %v389 = vsel %vm116, %v369, 0
    %v392 = vsel %vm120, %v374, 0
    %v395 = vsel %vm120, %v375, 0
    %397 = vmatprep.subr.mxu0 %v371
    %398 = vmatpush1.msra.mxu0 %v370
    %399 = vmatprep.subr.mxu0 %v373
    %400 = vmatpush1.msra.mxu0 %v372
    %401 = vmatprep.subr.mxu0 %v395
    %402 = vmatpush1.msra.mxu0 %v392
    %403 = vmatprep.subr.mxu0 0.0
    %404 = vmatpush1.msra.mxu0 0.0
    %405 = vmatprep.subr.mxu0 0.0
    %406 = vmatpush1.msra.mxu0 0.0
    %407 = vmatprep.subr.mxu0 0.0
    %408 = vmatpush1.msra.mxu0 0.0
    %409 = vmatprep.subr.mxu0 0.0
    %410 = vmatpush1.msra.mxu0 0.0
    %411 = vmatprep.subr.mxu0 0.0
    %412 = vmatpush1.msra.mxu0 0.0
    %413 = vmatprep.subr.mxu0 0.0
    %414 = vmatpush1.msra.mxu0 0.0
    %415 = vmatprep.subr.mxu0 0.0
    %416 = vmatpush1.msra.mxu0 0.0
    %417 = vmatprep.subr.mxu0 0.0
    %418 = vmatpush1.msra.mxu0 0.0
    %419 = vmatprep.subr.mxu0 0.0
    %420 = vmatpush1.msra.mxu0 0.0
    %421 = vmatprep.subr.mxu0 0.0
    %422 = vmatpush1.msra.mxu0 0.0
    %423 = vmatprep.subr.mxu0 0.0
    %424 = vmatpush1.msra.mxu0 0.0
    %425 = vmatprep.subr.mxu0 0.0
    %426 = vmatpush1.msra.mxu0 0.0
    %427 = vmatprep.subr.mxu0 0.0
    %428 = vmatpush1.msra.mxu0 0.0
    %429 = vmatprep.subr.mxu0 0.0
    %430 = vmatpush1.msra.mxu0 0.0
    %431 = vmatprep.subr.mxu0 0.0
    %432 = vmatpush1.msra.mxu0 0.0
    %433 = vmatprep.subr.mxu0 0.0
    %434 = vmatpush1.msra.mxu0 0.0
    %435 = vmatprep.subr.mxu0 0.0
    %436 = vmatpush1.msra.mxu0 0.0
    %437 = vmatprep.subr.mxu0 0.0
    %438 = vmatpush1.msra.mxu0 0.0
    %439 = vmatprep.subr.mxu0 0.0
    %440 = vmatpush1.msra.mxu0 0.0
    %441 = vmatprep.subr.mxu0 0.0
    %442 = vmatpush1.msra.mxu0 0.0
    %443 = vmatprep.subr.mxu0 0.0
    %444 = vmatpush1.msra.mxu0 0.0
    %445 = vmatprep.subr.mxu0 0.0
    %446 = vmatpush1.msra.mxu0 0.0
    %447 = vmatprep.subr.mxu0 0.0
    %448 = vmatpush1.msra.mxu0 0.0
    %449 = vmatprep.subr.mxu0 0.0
    %450 = vmatpush1.msra.mxu0 0.0
    %451 = vmatprep.subr.mxu0 0.0
    %452 = vmatpush1.msra.mxu0 0.0
    %453 = vmatprep.subr.mxu0 0.0
    %454 = vmatpush1.msra.mxu0 0.0
    %455 = vmatprep.subr.mxu0 0.0
    %456 = vmatpush1.msra.mxu0 0.0
    %457 = vmatprep.subr.mxu0 0.0
    %458 = vmatpush1.msra.mxu0 0.0
    %459 = vmatprep.subr.mxu0 0.0
    %460 = vmatpush1.msra.mxu0 0.0
    %461 = vmatprep.mubr.f32.mxu0 0.0
    %462 = vmatmul.mubr.f32.gmra.mrb[0].mxu0 %v389
    %v463 = vpop.f32.mrb[0].mxu0
    %v464 = vadd.f32 %v381, %v463
    %v465 = vpop.f32.mrb[0].mxu0
    %v466 = vadd.f32 %v385, %v465
    %467 = vdwg.mxu0
    %v468 = vmax.f32 %v464, 0.0
    %v469 = vmax.f32 %v466, 0.0
    %v470 = vld [vmem:[%s9] sm:$0x3]
    %v472 = vlaneseq
    %v473 = vshrl.u32 %v472, 7
    %v474 = vsub.s32 0, %v473
    %v475 = vrot.slane %v470, %v474
    %v476 = vlaneseq
    %v477 = vshrl.u32 %v476, 7
    %v478 = vsub.s32 1, %v477
    %v479 = vrot.slane %v470, %v478
    %v482 = vmul.f32 %v468, %v475
    %v483 = vmul.f32 %v469, %v479
    %v484 = vadd.f32 %v482, %v483
    %485 = vadd.xlane.f32.xlu0 %v484
    %v486 = vpop.xlane.xlu0 %485
    %s487 = sld [smem:[#allocation3]]
    %v488 = vstv %s487
    %v489 = vadd.f32 %v486, %v488
    %v491 = vlaneseq
    %v492 = vand.u32 %v491, 127
    %v493 = vlaneseq
    %v494 = vshrl.u32 %v493, 7
    %v495 = vsub.s32 %v492, %v494
    %v496 = vrot.slane %v368, %v495
    %v499 = vlaneseq
    %v500 = vshrl.u32 %v499, 7
    %v501 = vsub.s32 %v492, %v500
    %v502 = vrot.slane %v489, %v501
    %vm504 = vcmask 1040384
    %v505 = vsel %vm504, %v496, %v502
    %vm506 = vcmask 58368
    %507 = vst.msk [vmem:[#allocation12] sm:$0x3] %vm506, %v505
    // Predicated region
    $region66: #{tpu_custom_call.1} parent=1 // pred_check
      _
    $region67: #{tpu_custom_call.1} parent=1 // pred_check_branch
      %509 = sbr.rel (0) target = $region69
    $region68: #{tpu_custom_call.1} parent=1 // pred_region
      %s511 = ssub.s32 32, 32
      %512 = vsyncadd [#allocation6], %s511
      %s514 = sshll.u32 [#allocation12], 4
      %s515 = int_to_ptr.vmem [resolvable:$true] %s514
      %517 = dma.vmem_to_hbm [thread:$0]  %s515, 32, %s12, [#allocation6]
    $region69: #{tpu_custom_call.1} parent=1 // pred_fallthru
      _
    // Predicated region
    $region70: #{tpu_custom_call.1} parent=1 // pred_check
      _
    $region71: #{tpu_custom_call.1} parent=1 // pred_check_branch
      %519 = sbr.rel (0) target = $region73
    $region72: #{tpu_custom_call.1} parent=1 // pred_region
      %520 = dma.done [#allocation6], 32
    $region73: #{tpu_custom_call.1} parent=1 // pred_fallthru
      _
    %521 = vsyncpa [#allocation5], 1
    %522 = vsyncpa [#allocation8], 1
    %523 = vsyncpa [#allocation11], 1
    %524 = vsyncpa [#allocation6], 1

</llo_original>
